<compile_context>
chip_gen: v7x
topology: tpu7x:2x2x1
jax: 0.10.0
libtpu: 0.0.40
codegen_flags: <defaults>
</compile_context>

<pallas_src>
import jax
import jax.numpy as jnp
from jax import lax
from jax.experimental import pallas as pl
from jax.experimental.pallas import tpu as pltpu


# ---------- Stage 1: Z[:, f*tF:(f+1)*tF] = x_flat @ W[f*tF:(f+1)*tF, :].T + b ----------

def _z_kernel(x_ref, w_ref, b_ref, z_ref):
    # x_ref : (B, In)   resident x.reshape(B, N*D)
    # w_ref : (tF, In)  contiguous out_features slab of the torch-layout weight
    # b_ref : (1, tF)   matching bias slice
    # z_ref : (B, tF)   disjoint f32 slice of Z (no accumulation needed)
    z = lax.dot_general(
        x_ref[...], w_ref[...],
        dimension_numbers=(((1,), (1,)), ((), ())),   # "NT": no transpose anywhere
        preferred_element_type=jnp.float32)
    z_ref[...] = z + b_ref[...].astype(jnp.float32)


# ---------- Stage 2: Y = x2 @ Zr ; LeakyReLU(0.001) ----------

def _epilogue_kernel(x2_ref, zr_ref, o_ref):
    # x2_ref: (tm, D)  rows of x.reshape(B*N, D)
    # zr_ref: (D, K)   resident Z.reshape(D, K) (f32)
    # o_ref : (tm, K)
    y = jnp.dot(x2_ref[...].astype(jnp.float32), zr_ref[...],
                preferred_element_type=jnp.float32)
    o_ref[...] = jnp.where(y > 0, y, 0.001 * y).astype(o_ref.dtype)


# ---------- host-side sizing helpers ----------

def _vmem_budget():
    """(weight_slab_cap_bytes, vmem_limit_clamp_bytes), generation-aware."""
    try:
        cap = int(pltpu.get_tpu_info().vmem_capacity_bytes)
    except Exception:
        cap = 64 << 20  # conservative default: assume v7x-sized VMEM
    if cap >= (100 << 20):          # v5e / v6e: 128 MiB physical VMEM
        return 22 << 20, 96 << 20
    return 8 << 20, 40 << 20        # v7x: 64 MiB physical VMEM


def _pick_tf(F, In, itemsize, slab_cap):
    """Largest multiple-of-128 divisor of F whose contiguous (tF, In) weight slab
    fits under slab_cap.  tF is the lane dim of the Z output block, so it must be
    a multiple of 128 or the full extent F."""
    if F % 128 != 0:
        return F
    m = F // 128
    best = 128
    for d in range(1, m + 1):
        if m % d == 0 and (128 * d) * In * itemsize <= slab_cap:
            best = 128 * d
    return best


def _pick_tm(rows, cap=512):
    """Row tile for the epilogue: full extent if small, else a multiple-of-8 divisor."""
    if rows <= cap:
        return rows
    for tm in range(cap - cap % 8, 7, -8):
        if rows % tm == 0:
            return tm
    return rows


def _weight_spec(tF, In, bufs):
    if bufs > 2:
        try:
            return pl.BlockSpec((tF, In), lambda f: (f, 0),
                                pipeline_mode=pl.Buffered(bufs))
        except Exception:
            pass  # fall back to default 2-deep pipelining
    return pl.BlockSpec((tF, In), lambda f: (f, 0))


@jax.jit
def latent_matrix_transformer(x, weight, bias):
    """x: (B, N, D); weight: (F, N*D) torch nn.Linear layout; bias: (F,)."""
    B, N, D = x.shape
    F, In = weight.shape
    assert In == N * D, "Linear in_features must equal N * InLatent_dim"
    assert (B * F) % D == 0, "Z.reshape(D, -1) requires (B * out_features) % D == 0"
    K = (B * F) // D
    rows = B * N

    bpe_w = jnp.dtype(weight.dtype).itemsize
    bpe_x = jnp.dtype(x.dtype).itemsize
    bpe_b = jnp.dtype(bias.dtype).itemsize

    slab_cap, vmem_clamp = _vmem_budget()
    tF = _pick_tf(F, In, bpe_w, slab_cap)
    nf = F // tF

    # VMEM budget for stage 1 (weight stream dominates; everything else is small).
    w_slab = tF * In * bpe_w
    other_bytes = (2 * B * In * bpe_x     # resident x_flat (buffer headroom)
                   + 2 * tF * bpe_b       # bias slices
                   + 2 * B * tF * 4)      # f32 Z output blocks
    w_bufs = 3 if (nf >= 3 and 3 * w_slab + other_bytes <= int(vmem_clamp * 0.85)) else 2
    z_vmem = int(min(max(int((w_bufs * w_slab + other_bytes) * 1.25), 32 << 20),
                     vmem_clamp))

    # Host-side (free) reshapes; no relayouts inside the kernels.
    x_flat = x.reshape(B, In)
    b2 = bias.reshape(1, F)

    z = pl.pallas_call(
        _z_kernel,
        out_shape=jax.ShapeDtypeStruct((B, F), jnp.float32),
        grid_spec=pltpu.PrefetchScalarGridSpec(
            num_scalar_prefetch=0,
            grid=(nf,),
            in_specs=[
                pl.BlockSpec((B, In), lambda f: (0, 0)),   # x_flat resident
                _weight_spec(tF, In, w_bufs),              # contiguous weight slab stream
                pl.BlockSpec((1, tF), lambda f: (0, f)),   # bias slice
            ],
            out_specs=pl.BlockSpec((B, tF), lambda f: (0, f)),
        ),
        compiler_params=pltpu.CompilerParams(
            # F tiles are independent -> shardable across TensorCores (v7x megacore).
            dimension_semantics=("parallel",),
            vmem_limit_bytes=z_vmem,
        ),
        cost_estimate=pl.CostEstimate(
            flops=2 * B * In * F, transcendentals=0,
            bytes_accessed=int(F * In * bpe_w + F * bpe_b
                               + B * In * bpe_x + B * F * 4)),
    )(x_flat, weight, b2)

    # Free XLA reshape in HBM between the two kernels (no in-kernel relayout).
    zr = z.reshape(D, K)               # (D, K), f32
    x2 = x.reshape(rows, D)            # (B*N, D)

    tm = _pick_tm(rows)
    nm = rows // tm
    epi_needed = 2 * tm * D * bpe_x + 2 * D * K * 4 + 2 * tm * K * bpe_x
    epi_vmem = int(min(max(4 * epi_needed, 16 << 20), vmem_clamp))

    y2d = pl.pallas_call(
        _epilogue_kernel,
        out_shape=jax.ShapeDtypeStruct((rows, K), x.dtype),
        grid_spec=pltpu.PrefetchScalarGridSpec(
            num_scalar_prefetch=0,
            grid=(nm,),
            in_specs=[
                pl.BlockSpec((tm, D), lambda m: (m, 0)),   # x2 row tiles
                pl.BlockSpec((D, K), lambda m: (0, 0)),    # Zr resident
            ],
            out_specs=pl.BlockSpec((tm, K), lambda m: (m, 0)),
        ),
        compiler_params=pltpu.CompilerParams(
            dimension_semantics=("parallel",),
            vmem_limit_bytes=epi_vmem,
        ),
        cost_estimate=pl.CostEstimate(
            flops=2 * rows * D * K, transcendentals=0,
            bytes_accessed=int(rows * D * bpe_x + D * K * 4 + rows * K * bpe_x)),
    )(x2, zr)

    return y2d.reshape(B, N, K)


def _reference(x, weight, bias):
    B, N, D = x.shape
    z = x.reshape(B, -1) @ weight.T + bias      # (B, F)
    zr = z.reshape(D, -1)                       # (D, K)
    y = jnp.einsum("bnd,dk->bnk", x, zr)
    return jnp.where(y > 0, y, 0.001 * y)


if __name__ == "__main__":
    # Small shapes consistent with the module:
    #   InNode_num = 8, InLatent_dim = 16, OutLatentDim = 16, batch = 2
    B, N, D, Dout = 2, 8, 16, 16
    key = jax.random.PRNGKey(0)
    kx, kw, kb = jax.random.split(key, 3)

    x = jax.random.normal(kx, (B, N, D), dtype=jnp.float32)

    in_features = N * D
    out_features = N * Dout
    bound = 1.0 / (in_features ** 0.5)
    weight = jax.random.uniform(kw, (out_features, in_features),
                                minval=-bound, maxval=bound, dtype=jnp.float32)
    bias = jax.random.uniform(kb, (out_features,),
                              minval=-bound, maxval=bound, dtype=jnp.float32)

    out = latent_matrix_transformer(x, weight, bias)
    out = jax.block_until_ready(out)

    ref = _reference(x, weight, bias)
    assert out.shape == ref.shape
    assert jnp.allclose(out, ref, atol=1e-4, rtol=1e-4), "mismatch vs reference"

    print("KERNEL_OK")
</pallas_src>

<mosaic_0001>
module attributes {stable_mosaic.version = 11 : i64} {
  func.func @_epilogue_kernel(%arg0: i32, %arg1: memref<16x16xf32, #tpu.memory_space<vmem>>, %arg2: memref<16x16xf32, #tpu.memory_space<vmem>>, %arg3: memref<16x16xf32, #tpu.memory_space<vmem>>) attributes {dimension_semantics = [#tpu.dimension_semantics<parallel>], iteration_bounds = array<i64: 1>, scalar_prefetch = 0 : i64, scratch_operands = 0 : i64, tpu.core_type = #tpu.core_type<tc>, window_params = [{transform_indices = @transform_0, window_bounds = array<i64: 16, 16>}, {pipeline_mode = #tpu.pipeline_mode<synchronous>, transform_indices = @transform_1, window_bounds = array<i64: 16, 16>}, {transform_indices = @transform_2, window_bounds = array<i64: 16, 16>}]} {
    %c0 = arith.constant 0 : index
    %c0_0 = arith.constant 0 : index
    %0 = vector.load %arg1[%c0, %c0_0] : memref<16x16xf32, #tpu.memory_space<vmem>>, vector<16x16xf32>
    %c0_1 = arith.constant 0 : index
    %c0_2 = arith.constant 0 : index
    %1 = vector.load %arg2[%c0_1, %c0_2] : memref<16x16xf32, #tpu.memory_space<vmem>>, vector<16x16xf32>
    %cst = arith.constant dense<0.000000e+00> : vector<16x16xf32>
    %2 = tpu.matmul %0, %1, %cst {dimension_numbers = #tpu.dot_dimension_numbers<[1], [0], [0], [1], [0, 0, 1, 1], [], []>} : vector<16x16xf32>, vector<16x16xf32>, vector<16x16xf32> -> vector<16x16xf32>
    %cst_3 = arith.constant 0.000000e+00 : f32
    %3 = vector.broadcast %cst_3 : f32 to vector<16x16xf32>
    %4 = arith.cmpf ogt, %2, %3 : vector<16x16xf32>
    %cst_4 = arith.constant 1.000000e-03 : f32
    %5 = vector.broadcast %cst_4 : f32 to vector<16x16xf32>
    %6 = arith.mulf %5, %2 : vector<16x16xf32>
    %7 = arith.select %4, %2, %6 : vector<16x16xi1>, vector<16x16xf32>
    %c0_5 = arith.constant 0 : index
    %c0_6 = arith.constant 0 : index
    %8 = vector.load %arg3[%c0_5, %c0_6] : memref<16x16xf32, #tpu.memory_space<vmem>>, vector<16x16xf32>
    tpu.vector_store %arg3[%c0_5, %c0_6], %7 {strides = array<i32>} : memref<16x16xf32, #tpu.memory_space<vmem>>, vector<16x16xf32>,
    return
  }
  func.func @transform_0(%arg0: i32) -> (i32, i32) {
    %c0_i32 = arith.constant 0 : i32
    %c0_i32_0 = arith.constant 0 : i32
    return %arg0, %c0_i32 : i32, i32
  }
  func.func @transform_1(%arg0: i32) -> (i32, i32) {
    %c0_i32 = arith.constant 0 : i32
    %c0_i32_0 = arith.constant 0 : i32
    %c0_i32_1 = arith.constant 0 : i32
    return %c0_i32, %c0_i32_0 : i32, i32
  }
  func.func @transform_2(%arg0: i32) -> (i32, i32) {
    %c0_i32 = arith.constant 0 : i32
    %c0_i32_0 = arith.constant 0 : i32
    return %arg0, %c0_i32 : i32, i32
  }
}

module attributes {stable_mosaic.version = 11 : i64} {
  func.func @_z_kernel(%arg0: i32, %arg1: memref<2x128xf32, #tpu.memory_space<vmem>>, %arg2: memref<128x128xf32, #tpu.memory_space<vmem>>, %arg3: memref<1x128xf32, #tpu.memory_space<vmem>>, %arg4: memref<2x128xf32, #tpu.memory_space<vmem>>) attributes {dimension_semantics = [#tpu.dimension_semantics<parallel>], iteration_bounds = array<i64: 1>, scalar_prefetch = 0 : i64, scratch_operands = 0 : i64, tpu.core_type = #tpu.core_type<tc>, window_params = [{pipeline_mode = #tpu.pipeline_mode<synchronous>, transform_indices = @transform_0, window_bounds = array<i64: 2, 128>}, {transform_indices = @transform_1, window_bounds = array<i64: 128, 128>}, {transform_indices = @transform_2, window_bounds = array<i64: 1, 128>}, {transform_indices = @transform_3, window_bounds = array<i64: 2, 128>}]} {
    %c0 = arith.constant 0 : index
    %c0_0 = arith.constant 0 : index
    %0 = vector.load %arg1[%c0, %c0_0] : memref<2x128xf32, #tpu.memory_space<vmem>>, vector<2x128xf32>
    %c0_1 = arith.constant 0 : index
    %c0_2 = arith.constant 0 : index
    %1 = vector.load %arg2[%c0_1, %c0_2] : memref<128x128xf32, #tpu.memory_space<vmem>>, vector<128x128xf32>
    %cst = arith.constant dense<0.000000e+00> : vector<2x128xf32>
    %2 = tpu.matmul %0, %1, %cst {dimension_numbers = #tpu.dot_dimension_numbers<[1], [1], [0], [0], [0, 0, 1, 0], [], []>} : vector<2x128xf32>, vector<128x128xf32>, vector<2x128xf32> -> vector<2x128xf32>
    %c0_3 = arith.constant 0 : index
    %c0_4 = arith.constant 0 : index
    %3 = vector.load %arg3[%c0_3, %c0_4] : memref<1x128xf32, #tpu.memory_space<vmem>>, vector<1x128xf32>
    %4 = vector.broadcast %3 : vector<1x128xf32> to vector<2x128xf32>
    %5 = arith.addf %2, %4 : vector<2x128xf32>
    %c0_5 = arith.constant 0 : index
    %c0_6 = arith.constant 0 : index
    %6 = vector.load %arg4[%c0_5, %c0_6] : memref<2x128xf32, #tpu.memory_space<vmem>>, vector<2x128xf32>
    tpu.vector_store %arg4[%c0_5, %c0_6], %5 {strides = array<i32>} : memref<2x128xf32, #tpu.memory_space<vmem>>, vector<2x128xf32>,
    return
  }
  func.func @transform_0(%arg0: i32) -> (i32, i32) {
    %c0_i32 = arith.constant 0 : i32
    %c0_i32_0 = arith.constant 0 : i32
    %c0_i32_1 = arith.constant 0 : i32
    return %c0_i32, %c0_i32_0 : i32, i32
  }
  func.func @transform_1(%arg0: i32) -> (i32, i32) {
    %c0_i32 = arith.constant 0 : i32
    %c0_i32_0 = arith.constant 0 : i32
    return %arg0, %c0_i32 : i32, i32
  }
  func.func @transform_2(%arg0: i32) -> (i32, i32) {
    %c0_i32 = arith.constant 0 : i32
    %c0_i32_0 = arith.constant 0 : i32
    return %c0_i32, %arg0 : i32, i32
  }
  func.func @transform_3(%arg0: i32) -> (i32, i32) {
    %c0_i32 = arith.constant 0 : i32
    %c0_i32_0 = arith.constant 0 : i32
    return %c0_i32, %arg0 : i32, i32
  }
}

</mosaic_0001>

<llo_original>
// kernel: latent_matrix_transformer.2
$region0: #{latent_matrix_transformer.2}
  #allocation0 [shape = 'u32[]', space=smem, size = 0x4, offset = 0x4, fixed_abs, tag = 'smem constant byte address 0x4 - core index']
  #allocation1 [shape = 'u32[144,128]{1,0:T(1,128)}', space=vmem, size = 0x12000, scoped, tag = 'internal scratch']
  %s0 = inlined_call_operand.vmem [shape: f32[2,128], index: 0, kind: input, shape index: {}]
  %s1 = inlined_call_operand.hbm [shape: f32[128,128], index: 1, kind: input, shape index: {}]
  %s2 = inlined_call_operand.vmem [shape: f32[1,128], index: 2, kind: input, shape index: {}]
  %s3 = inlined_call_operand.vmem [shape: f32[2,128], index: 3, kind: output, shape index: {}]
  %s4 = sld [smem:[#allocation0]]
  $region26: #{latent_matrix_transformer.2} parent=0
    _
  %s6 = ssub.s32 1, %s4
  %s7 = scalar_select 0, %s6, %s4
  $region1: #{latent_matrix_transformer.2} parent=0
    #allocation2 [shape = 'u8[65536]{0}', space=vmem, size = 0x10000, scoped, tag = 'input window, operand 1, single buffered']
    #allocation3 [shape = 's32[1]{0}', space=sflag, size = 0x4, scoped, tag = 'scoped memory for latent_matrix_transformer.2']
    %8 = vsyncpa [#allocation3], 0
    // Predicated region
    $region2: #{latent_matrix_transformer.2} parent=1 // pred_check
      _
    $region3: #{latent_matrix_transformer.2} parent=1 // pred_check_branch
      %10 = sbr.rel (0) target = $region5
    $region4: #{latent_matrix_transformer.2} parent=1 // pred_region
      _
    $region5: #{latent_matrix_transformer.2} parent=1 // pred_fallthru
      _
    // Predicated region
    $region6: #{latent_matrix_transformer.2} parent=1 // pred_check
      _
    $region7: #{latent_matrix_transformer.2} parent=1 // pred_check_branch
      %12 = sbr.rel (0) target = $region9
    $region8: #{latent_matrix_transformer.2} parent=1 // pred_region
      %s14 = ssub.s32 2048, 2048
      %15 = vsyncadd [#allocation3], %s14
      %s16 = sshll.u32 [#allocation2], 4
      %s17 = int_to_ptr.vmem [resolvable:$true] %s16
      %22 = dma.hbm_to_vmem [thread:$0]  %s1, 2048, %s17, [#allocation3], 128, 128, 8
    $region9: #{latent_matrix_transformer.2} parent=1 // pred_fallthru
      _
    // Predicated region
    $region10: #{latent_matrix_transformer.2} parent=1 // pred_check
      _
    $region11: #{latent_matrix_transformer.2} parent=1 // pred_check_branch
      %24 = sbr.rel (0) target = $region13
    $region12: #{latent_matrix_transformer.2} parent=1 // pred_region
      _
    $region13: #{latent_matrix_transformer.2} parent=1 // pred_fallthru
      _
    // Predicated region
    $region14: #{latent_matrix_transformer.2} parent=1 // pred_check
      _
    $region15: #{latent_matrix_transformer.2} parent=1 // pred_check_branch
      %26 = sbr.rel (0) target = $region17
    $region16: #{latent_matrix_transformer.2} parent=1 // pred_region
      %27 = dma.done [#allocation3], 2048
    $region17: #{latent_matrix_transformer.2} parent=1 // pred_fallthru
      _
    %v28 = vld [vmem:[%s0] sm:$0x3]
    %v29 = vld [vmem:[#allocation2] sm:$0xff]
    %v30 = vld [vmem:[#allocation2 + $0x8] sm:$0xff]
    %v31 = vld [vmem:[#allocation2 + $0x10] sm:$0xff]
    %v32 = vld [vmem:[#allocation2 + $0x18] sm:$0xff]
    %v33 = vld [vmem:[#allocation2 + $0x20] sm:$0xff]
    %v34 = vld [vmem:[#allocation2 + $0x28] sm:$0xff]
    %v35 = vld [vmem:[#allocation2 + $0x30] sm:$0xff]
    %v36 = vld [vmem:[#allocation2 + $0x38] sm:$0xff]
    %v37 = vld [vmem:[#allocation2 + $0x40] sm:$0xff]
    %v38 = vld [vmem:[#allocation2 + $0x48] sm:$0xff]
    %v39 = vld [vmem:[#allocation2 + $0x50] sm:$0xff]
    %v40 = vld [vmem:[#allocation2 + $0x58] sm:$0xff]
    %v41 = vld [vmem:[#allocation2 + $0x60] sm:$0xff]
    %v42 = vld [vmem:[#allocation2 + $0x68] sm:$0xff]
    %v43 = vld [vmem:[#allocation2 + $0x70] sm:$0xff]
    %v44 = vld [vmem:[#allocation2 + $0x78] sm:$0xff]
    %v45 = vld [vmem:[%s2] sm:$0x1]
    %v47 = vlaneseq
    %v48 = vshrl.u32 %v47, 7
    %v49 = vsub.s32 0, %v48
    %v50 = vrot.slane %v45, %v49
    %52 = vmatprep.subr.mxu0 0.0
    %53 = vmatpush1.xpose.msra.mxu0 %v29
    %54 = vmatprep.subr.mxu0 0.0
    %55 = vmatpush1.xpose.msra.mxu0 %v30
    %56 = vmatprep.subr.mxu0 0.0
    %57 = vmatpush1.xpose.msra.mxu0 %v31
    %58 = vmatprep.subr.mxu0 0.0
    %59 = vmatpush1.xpose.msra.mxu0 %v32
    %60 = vmatprep.subr.mxu0 0.0
    %61 = vmatpush1.xpose.msra.mxu0 %v33
    %62 = vmatprep.subr.mxu0 0.0
    %63 = vmatpush1.xpose.msra.mxu0 %v34
    %64 = vmatprep.subr.mxu0 0.0
    %65 = vmatpush1.xpose.msra.mxu0 %v35
    %66 = vmatprep.subr.mxu0 0.0
    %67 = vmatpush1.xpose.msra.mxu0 %v36
    %68 = vmatprep.subr.mxu0 0.0
    %69 = vmatpush1.xpose.msra.mxu0 %v37
    %70 = vmatprep.subr.mxu0 0.0
    %71 = vmatpush1.xpose.msra.mxu0 %v38
    %72 = vmatprep.subr.mxu0 0.0
    %73 = vmatpush1.xpose.msra.mxu0 %v39
    %74 = vmatprep.subr.mxu0 0.0
    %75 = vmatpush1.xpose.msra.mxu0 %v40
    %76 = vmatprep.subr.mxu0 0.0
    %77 = vmatpush1.xpose.msra.mxu0 %v41
    %78 = vmatprep.subr.mxu0 0.0
    %79 = vmatpush1.xpose.msra.mxu0 %v42
    %80 = vmatprep.subr.mxu0 0.0
    %81 = vmatpush1.xpose.msra.mxu0 %v43
    %82 = vmatprep.subr.mxu0 0.0
    %83 = vmatpush1.xpose.msra.mxu0 %v44
    %84 = vmatprep.subr.mxu0 0.0
    %85 = vmatpush1.xpose.msra.mxu0 0.0
    %86 = vmatprep.subr.mxu0 0.0
    %87 = vmatpush1.xpose.msra.mxu0 0.0
    %88 = vmatprep.subr.mxu0 0.0
    %89 = vmatpush1.xpose.msra.mxu0 0.0
    %90 = vmatprep.subr.mxu0 0.0
    %91 = vmatpush1.xpose.msra.mxu0 0.0
    %92 = vmatprep.subr.mxu0 0.0
    %93 = vmatpush1.xpose.msra.mxu0 0.0
    %94 = vmatprep.subr.mxu0 0.0
    %95 = vmatpush1.xpose.msra.mxu0 0.0
    %96 = vmatprep.subr.mxu0 0.0
    %97 = vmatpush1.xpose.msra.mxu0 0.0
    %98 = vmatprep.subr.mxu0 0.0
    %99 = vmatpush1.xpose.msra.mxu0 0.0
    %100 = vmatprep.subr.mxu0 0.0
    %101 = vmatpush1.xpose.msra.mxu0 0.0
    %102 = vmatprep.subr.mxu0 0.0
    %103 = vmatpush1.xpose.msra.mxu0 0.0
    %104 = vmatprep.subr.mxu0 0.0
    %105 = vmatpush1.xpose.msra.mxu0 0.0
    %106 = vmatprep.subr.mxu0 0.0
    %107 = vmatpush1.xpose.msra.mxu0 0.0
    %108 = vmatprep.subr.mxu0 0.0
    %109 = vmatpush1.xpose.msra.mxu0 0.0
    %110 = vmatprep.subr.mxu0 0.0
    %111 = vmatpush1.xpose.msra.mxu0 0.0
    %112 = vmatprep.subr.mxu0 0.0
    %113 = vmatpush1.xpose.msra.mxu0 0.0
    %114 = vmatprep.subr.mxu0 0.0
    %115 = vmatpush1.xpose.msra.mxu0 0.0
    %116 = vmatprep.mubr.f32.mxu0 0.0
    %117 = vmatmul.mubr.f32.gmra.mrb[0].mxu0 %v28
    %v118 = vpop.f32.mrb[0].mxu0
    %v119 = vadd.f32 %v50, %v118
    %v120 = vpop.f32.mrb[0].mxu0
    %121 = vdwg.mxu0
    %122 = vst [vmem:[%s3] sm:$0x3] %v119
    // Predicated region
    $region18: #{latent_matrix_transformer.2} parent=1 // pred_check
      _
    $region19: #{latent_matrix_transformer.2} parent=1 // pred_check_branch
      %124 = sbr.rel (0) target = $region21
    $region20: #{latent_matrix_transformer.2} parent=1 // pred_region
      _
    $region21: #{latent_matrix_transformer.2} parent=1 // pred_fallthru
      _
    // Predicated region
    $region22: #{latent_matrix_transformer.2} parent=1 // pred_check
      _
    $region23: #{latent_matrix_transformer.2} parent=1 // pred_check_branch
      %126 = sbr.rel (0) target = $region25
    $region24: #{latent_matrix_transformer.2} parent=1 // pred_region
      _
    $region25: #{latent_matrix_transformer.2} parent=1 // pred_fallthru
      _
    %127 = vsyncpa [#allocation3], 1

// kernel: latent_matrix_transformer.3
$region0: #{latent_matrix_transformer.3}
  #allocation0 [shape = 'u32[]', space=smem, size = 0x4, offset = 0x4, fixed_abs, tag = 'smem constant byte address 0x4 - core index']
  #allocation1 [shape = 'u32[144,128]{1,0:T(1,128)}', space=vmem, size = 0x12000, scoped, tag = 'internal scratch']
  %s0 = inlined_call_operand.vmem [shape: f32[16,16], index: 0, kind: input, shape index: {}]
  %s1 = inlined_call_operand.vmem [shape: f32[16,16], index: 1, kind: input, shape index: {}]
  %s2 = inlined_call_operand.hbm [shape: f32[16,16], index: 2, kind: output, shape index: {}]
  %s3 = sld [smem:[#allocation0]]
  $region18: #{latent_matrix_transformer.3} parent=0
    _
  %s5 = ssub.s32 1, %s3
  %s6 = scalar_select 0, %s5, %s3
  $region1: #{latent_matrix_transformer.3} parent=0
    #allocation2 [shape = 'u8[8192]{0}', space=vmem, size = 0x2000, scoped, tag = 'output window, operand 0, single buffered']
    #allocation3 [shape = 's32[1]{0}', space=sflag, size = 0x4, scoped, tag = 'scoped memory for latent_matrix_transformer.3']
    %7 = vsyncpa [#allocation3], 0
    // Predicated region
    $region2: #{latent_matrix_transformer.3} parent=1 // pred_check
      _
    $region3: #{latent_matrix_transformer.3} parent=1 // pred_check_branch
      %9 = sbr.rel (0) target = $region5
    $region4: #{latent_matrix_transformer.3} parent=1 // pred_region
      _
    $region5: #{latent_matrix_transformer.3} parent=1 // pred_fallthru
      _
    // Predicated region
    $region6: #{latent_matrix_transformer.3} parent=1 // pred_check
      _
    $region7: #{latent_matrix_transformer.3} parent=1 // pred_check_branch
      %11 = sbr.rel (0) target = $region9
    $region8: #{latent_matrix_transformer.3} parent=1 // pred_region
      _
    $region9: #{latent_matrix_transformer.3} parent=1 // pred_fallthru
      _
    %v12 = vld [vmem:[%s0] sm:$0xff]
    %v13 = vld [vmem:[%s0 + $0x8] sm:$0xff]
    %v14 = vld [vmem:[%s1] sm:$0xff]
    %v15 = vld [vmem:[%s1 + $0x8] sm:$0xff]
    %vm16 = vcmask 130048
    %v18 = vsel %vm16, %v12, 0
    %v21 = vsel %vm16, %v13, 0
    %23 = vmatprep.subr.mxu0 0.0
    %24 = vmatpush1.msra.mxu0 %v14
    %25 = vmatprep.subr.mxu0 0.0
    %26 = vmatpush1.msra.mxu0 %v15
    %27 = vmatprep.subr.mxu0 0.0
    %28 = vmatpush1.msra.mxu0 0.0
    %29 = vmatprep.subr.mxu0 0.0
    %30 = vmatpush1.msra.mxu0 0.0
    %31 = vmatprep.subr.mxu0 0.0
    %32 = vmatpush1.msra.mxu0 0.0
    %33 = vmatprep.subr.mxu0 0.0
    %34 = vmatpush1.msra.mxu0 0.0
    %35 = vmatprep.subr.mxu0 0.0
    %36 = vmatpush1.msra.mxu0 0.0
    %37 = vmatprep.subr.mxu0 0.0
    %38 = vmatpush1.msra.mxu0 0.0
    %39 = vmatprep.subr.mxu0 0.0
    %40 = vmatpush1.msra.mxu0 0.0
    %41 = vmatprep.subr.mxu0 0.0
    %42 = vmatpush1.msra.mxu0 0.0
    %43 = vmatprep.subr.mxu0 0.0
    %44 = vmatpush1.msra.mxu0 0.0
    %45 = vmatprep.subr.mxu0 0.0
    %46 = vmatpush1.msra.mxu0 0.0
    %47 = vmatprep.subr.mxu0 0.0
    %48 = vmatpush1.msra.mxu0 0.0
    %49 = vmatprep.subr.mxu0 0.0
    %50 = vmatpush1.msra.mxu0 0.0
    %51 = vmatprep.subr.mxu0 0.0
    %52 = vmatpush1.msra.mxu0 0.0
    %53 = vmatprep.subr.mxu0 0.0
    %54 = vmatpush1.msra.mxu0 0.0
    %55 = vmatprep.subr.mxu0 0.0
    %56 = vmatpush1.msra.mxu0 0.0
    %57 = vmatprep.subr.mxu0 0.0
    %58 = vmatpush1.msra.mxu0 0.0
    %59 = vmatprep.subr.mxu0 0.0
    %60 = vmatpush1.msra.mxu0 0.0
    %61 = vmatprep.subr.mxu0 0.0
    %62 = vmatpush1.msra.mxu0 0.0
    %63 = vmatprep.subr.mxu0 0.0
    %64 = vmatpush1.msra.mxu0 0.0
    %65 = vmatprep.subr.mxu0 0.0
    %66 = vmatpush1.msra.mxu0 0.0
    %67 = vmatprep.subr.mxu0 0.0
    %68 = vmatpush1.msra.mxu0 0.0
    %69 = vmatprep.subr.mxu0 0.0
    %70 = vmatpush1.msra.mxu0 0.0
    %71 = vmatprep.subr.mxu0 0.0
    %72 = vmatpush1.msra.mxu0 0.0
    %73 = vmatprep.subr.mxu0 0.0
    %74 = vmatpush1.msra.mxu0 0.0
    %75 = vmatprep.subr.mxu0 0.0
    %76 = vmatpush1.msra.mxu0 0.0
    %77 = vmatprep.subr.mxu0 0.0
    %78 = vmatpush1.msra.mxu0 0.0
    %79 = vmatprep.subr.mxu0 0.0
    %80 = vmatpush1.msra.mxu0 0.0
    %81 = vmatprep.subr.mxu0 0.0
    %82 = vmatpush1.msra.mxu0 0.0
    %83 = vmatprep.subr.mxu0 0.0
    %84 = vmatpush1.msra.mxu0 0.0
    %85 = vmatprep.subr.mxu0 0.0
    %86 = vmatpush1.msra.mxu0 0.0
    %87 = vmatprep.mubr.f32.mxu0 0.0
    %88 = vmatmul.mubr.f32.gmra.mrb[0].mxu0 %v18
    %v89 = vpop.f32.mrb[0].mxu0
    %v90 = vadd.f32 0.0, %v89
    %v91 = vpop.f32.mrb[0].mxu0
    %92 = vmatprep.mubr.f32.mxu0 0.0
    %93 = vmatmul.mubr.f32.gmra.mrb[0].mxu0 %v21
    %v94 = vpop.f32.mrb[0].mxu0
    %v95 = vadd.f32 0.0, %v94
    %v96 = vpop.f32.mrb[0].mxu0
    %97 = vdwg.mxu0
    %vm98 = vcmp.gt.f32.partialorder %v90, 0.0
    %vm99 = vcmp.gt.f32.partialorder %v95, 0.0
    %v100 = vmul.f32 %v90, 0.001
    %v101 = vmul.f32 %v95, 0.001
    %v102 = vsel %vm98, %v90, %v100
    %v103 = vsel %vm99, %v95, %v101
    %104 = vst.msk [vmem:[#allocation2] sm:$0xff] %vm16, %v102
    %105 = vst.msk [vmem:[#allocation2 + $0x8] sm:$0xff] %vm16, %v103
    // Predicated region
    $region10: #{latent_matrix_transformer.3} parent=1 // pred_check
      _
    $region11: #{latent_matrix_transformer.3} parent=1 // pred_check_branch
      %107 = sbr.rel (0) target = $region13
    $region12: #{latent_matrix_transformer.3} parent=1 // pred_region
      %s109 = ssub.s32 256, 256
      %110 = vsyncadd [#allocation3], %s109
      %s111 = sshll.u32 [#allocation2], 4
      %s112 = int_to_ptr.vmem [resolvable:$true] %s111
      %117 = dma.vmem_to_hbm [thread:$0]  %s112, 256, %s2, [#allocation3], 128, 128, 8
    $region13: #{latent_matrix_transformer.3} parent=1 // pred_fallthru
      _
    // Predicated region
    $region14: #{latent_matrix_transformer.3} parent=1 // pred_check
      _
    $region15: #{latent_matrix_transformer.3} parent=1 // pred_check_branch
      %119 = sbr.rel (0) target = $region17
    $region16: #{latent_matrix_transformer.3} parent=1 // pred_region
      %120 = dma.done [#allocation3], 256
    $region17: #{latent_matrix_transformer.3} parent=1 // pred_fallthru
      _
    %121 = vsyncpa [#allocation3], 1

</llo_original>
